<compile_context>
chip_gen: v6e
topology: v6e:2x2x1
jax: 0.10.0
libtpu: 0.0.40
codegen_flags: <defaults>
</compile_context>

<pallas_src>
import jax
import jax.numpy as jnp
from jax.experimental import pallas as pl
from jax.experimental.pallas import tpu as pltpu

IN_F = 4          # input features
OUT_F = 2         # output features
LANE = 128        # TPU lane width
MAX_TILE_B = 1024 # max batch-tile (lanes) per grid step


def mlp_kernel(coef_ref, x_ref, o_ref):
    """o[j, b] = sum_i W_eff[i, j] * x[i, b] + b_eff[j]  (batch in lanes).

    coef_ref: (10,) f32 in SMEM. coef[i*OUT_F + j] = W_eff[i, j],
              coef[IN_F*OUT_F + j] = b_eff[j].
    x_ref:    (IN_F, TB)  f32 in VMEM (batch lane-dense).
    o_ref:    (OUT_F, TB) f32 in VMEM (batch lane-dense).
    """
    x = x_ref[...].astype(jnp.float32)                 # (IN_F, TB)
    rows = []
    for j in range(OUT_F):                              # unrolled, static
        acc = x[0:1, :] * coef_ref[0 * OUT_F + j]
        for i in range(1, IN_F):                         # unrolled FMA chain
            acc = acc + x[i:i + 1, :] * coef_ref[i * OUT_F + j]
        acc = acc + coef_ref[IN_F * OUT_F + j]           # bias (scalar bcast)
        rows.append(acc)
    o_ref[...] = jnp.concatenate(rows, axis=0).astype(o_ref.dtype)


def _round_up(n, m):
    return ((n + m - 1) // m) * m


def _fold_params(params):
    """Fold the 3 linears into one affine map (valid: no nonlinearities)."""
    w1, b1 = params["w1"], params["b1"]   # (6,4), (6,)
    w2, b2 = params["w2"], params["b2"]   # (6,6), (6,)
    w3, b3 = params["w3"], params["b3"]   # (2,6), (2,)
    w_eff = w1.T @ w2.T @ w3.T                                   # (4, 2)
    b_eff = (b1 @ w2.T + b2) @ w3.T + b3                         # (2,)
    coef = jnp.concatenate(
        [w_eff.reshape(-1), b_eff]).astype(jnp.float32)          # (10,)
    return coef


@jax.jit
def mlp_forward(x, params):
    """x: (B, 4). params: PyTorch-layout dict w1,b1,w2,b2,w3,b3. Returns (B, 2)."""
    B = x.shape[0]
    coef = _fold_params(params)            # fuses into surrounding jit graph

    # Batch-in-lanes layout, padded to a lane-aligned tile.
    TB = min(MAX_TILE_B, _round_up(B, LANE))
    B_pad = _round_up(B, TB)
    x_t = jnp.zeros((IN_F, B_pad), jnp.float32).at[:, :B].set(
        x.T.astype(jnp.float32))

    out_t = pl.pallas_call(
        mlp_kernel,
        out_shape=jax.ShapeDtypeStruct((OUT_F, B_pad), jnp.float32),
        grid=(B_pad // TB,),
        in_specs=[
            pl.BlockSpec(memory_space=pltpu.MemorySpace.SMEM),   # coef scalars
            pl.BlockSpec((IN_F, TB), lambda b: (0, b)),          # x tile
        ],
        out_specs=pl.BlockSpec((OUT_F, TB), lambda b: (0, b)),
        compiler_params=pltpu.CompilerParams(
            dimension_semantics=("parallel",)),
    )(coef, x_t)

    return out_t[:, :B].T.astype(x.dtype)


def init_params(key):
    """Deterministic init mimicking torch.nn.Linear (uniform +/- 1/sqrt(fan_in))."""
    def linear(key, fan_in, fan_out):
        kw, kb = jax.random.split(key)
        bound = 1.0 / jnp.sqrt(fan_in)
        w = jax.random.uniform(kw, (fan_out, fan_in), jnp.float32, -bound, bound)
        b = jax.random.uniform(kb, (fan_out,), jnp.float32, -bound, bound)
        return w, b

    k1, k2, k3 = jax.random.split(key, 3)
    w1, b1 = linear(k1, 4, 6)
    w2, b2 = linear(k2, 6, 6)
    w3, b3 = linear(k3, 6, 2)
    return {"w1": w1, "b1": b1, "w2": w2, "b2": b2, "w3": w3, "b3": b3}


def reference_forward(x, p):
    h1 = x @ p["w1"].T + p["b1"]
    h2 = h1 @ p["w2"].T + p["b2"]
    return h2 @ p["w3"].T + p["b3"]


if __name__ == "__main__":
    key = jax.random.PRNGKey(0)
    kp, kx = jax.random.split(key)
    params = init_params(kp)
    x = jax.random.normal(kx, (8, 4), jnp.float32)   # batch=8, in_features=4

    out = mlp_forward(x, params)
    out = jax.block_until_ready(out)

    ref = reference_forward(x, params)
    assert out.shape == (8, 2), out.shape
    # Layer collapse reassociates fp adds/muls; tolerance comfortably covers it.
    assert jnp.allclose(out, ref, atol=1e-5, rtol=1e-5), "mismatch vs reference"
    print("KERNEL_OK")
</pallas_src>

<mosaic_0001>
module attributes {stable_mosaic.version = 11 : i64} {
  func.func @mlp_kernel(%arg0: i32, %arg1: memref<10xf32, #tpu.memory_space<smem>>, %arg2: memref<4x128xf32, #tpu.memory_space<vmem>>, %arg3: memref<2x128xf32, #tpu.memory_space<vmem>>) attributes {dimension_semantics = [#tpu.dimension_semantics<parallel>], iteration_bounds = array<i64: 1>, scalar_prefetch = 0 : i64, scratch_operands = 0 : i64, tpu.core_type = #tpu.core_type<tc>, window_params = [{transform_indices = @transform_0, window_bounds = array<i64: 10>}, {transform_indices = @transform_1, window_bounds = array<i64: 4, 128>}, {transform_indices = @transform_2, window_bounds = array<i64: 2, 128>}]} {
    %c0 = arith.constant 0 : index
    %c0_0 = arith.constant 0 : index
    %0 = vector.load %arg2[%c0, %c0_0] : memref<4x128xf32, #tpu.memory_space<vmem>>, vector<4x128xf32>
    %1 = vector.extract_strided_slice %0 {offsets = [0, 0], sizes = [1, 128], strides = [1, 1]} : vector<4x128xf32> to vector<1x128xf32>
    %c0_1 = arith.constant 0 : index
    %2 = memref.load %arg1[%c0_1] : memref<10xf32, #tpu.memory_space<smem>>
    %3 = vector.broadcast %2 : f32 to vector<1x128xf32>
    %4 = arith.mulf %1, %3 : vector<1x128xf32>
    %5 = vector.extract_strided_slice %0 {offsets = [1, 0], sizes = [1, 128], strides = [1, 1]} : vector<4x128xf32> to vector<1x128xf32>
    %c2 = arith.constant 2 : index
    %6 = memref.load %arg1[%c2] : memref<10xf32, #tpu.memory_space<smem>>
    %7 = vector.broadcast %6 : f32 to vector<1x128xf32>
    %8 = arith.mulf %5, %7 : vector<1x128xf32>
    %9 = arith.addf %4, %8 : vector<1x128xf32>
    %10 = vector.extract_strided_slice %0 {offsets = [2, 0], sizes = [1, 128], strides = [1, 1]} : vector<4x128xf32> to vector<1x128xf32>
    %c4 = arith.constant 4 : index
    %11 = memref.load %arg1[%c4] : memref<10xf32, #tpu.memory_space<smem>>
    %12 = vector.broadcast %11 : f32 to vector<1x128xf32>
    %13 = arith.mulf %10, %12 : vector<1x128xf32>
    %14 = arith.addf %9, %13 : vector<1x128xf32>
    %15 = vector.extract_strided_slice %0 {offsets = [3, 0], sizes = [1, 128], strides = [1, 1]} : vector<4x128xf32> to vector<1x128xf32>
    %c6 = arith.constant 6 : index
    %16 = memref.load %arg1[%c6] : memref<10xf32, #tpu.memory_space<smem>>
    %17 = vector.broadcast %16 : f32 to vector<1x128xf32>
    %18 = arith.mulf %15, %17 : vector<1x128xf32>
    %19 = arith.addf %14, %18 : vector<1x128xf32>
    %c8 = arith.constant 8 : index
    %20 = memref.load %arg1[%c8] : memref<10xf32, #tpu.memory_space<smem>>
    %21 = vector.broadcast %20 : f32 to vector<1x128xf32>
    %22 = arith.addf %19, %21 : vector<1x128xf32>
    %23 = vector.extract_strided_slice %0 {offsets = [0, 0], sizes = [1, 128], strides = [1, 1]} : vector<4x128xf32> to vector<1x128xf32>
    %c1 = arith.constant 1 : index
    %24 = memref.load %arg1[%c1] : memref<10xf32, #tpu.memory_space<smem>>
    %25 = vector.broadcast %24 : f32 to vector<1x128xf32>
    %26 = arith.mulf %23, %25 : vector<1x128xf32>
    %27 = vector.extract_strided_slice %0 {offsets = [1, 0], sizes = [1, 128], strides = [1, 1]} : vector<4x128xf32> to vector<1x128xf32>
    %c3 = arith.constant 3 : index
    %28 = memref.load %arg1[%c3] : memref<10xf32, #tpu.memory_space<smem>>
    %29 = vector.broadcast %28 : f32 to vector<1x128xf32>
    %30 = arith.mulf %27, %29 : vector<1x128xf32>
    %31 = arith.addf %26, %30 : vector<1x128xf32>
    %32 = vector.extract_strided_slice %0 {offsets = [2, 0], sizes = [1, 128], strides = [1, 1]} : vector<4x128xf32> to vector<1x128xf32>
    %c5 = arith.constant 5 : index
    %33 = memref.load %arg1[%c5] : memref<10xf32, #tpu.memory_space<smem>>
    %34 = vector.broadcast %33 : f32 to vector<1x128xf32>
    %35 = arith.mulf %32, %34 : vector<1x128xf32>
    %36 = arith.addf %31, %35 : vector<1x128xf32>
    %37 = vector.extract_strided_slice %0 {offsets = [3, 0], sizes = [1, 128], strides = [1, 1]} : vector<4x128xf32> to vector<1x128xf32>
    %c7 = arith.constant 7 : index
    %38 = memref.load %arg1[%c7] : memref<10xf32, #tpu.memory_space<smem>>
    %39 = vector.broadcast %38 : f32 to vector<1x128xf32>
    %40 = arith.mulf %37, %39 : vector<1x128xf32>
    %41 = arith.addf %36, %40 : vector<1x128xf32>
    %c9 = arith.constant 9 : index
    %42 = memref.load %arg1[%c9] : memref<10xf32, #tpu.memory_space<smem>>
    %43 = vector.broadcast %42 : f32 to vector<1x128xf32>
    %44 = arith.addf %41, %43 : vector<1x128xf32>
    %45 = tpu.concatenate %22, %44 in 0 : vector<1x128xf32>, vector<1x128xf32> -> vector<2x128xf32>
    %c0_2 = arith.constant 0 : index
    %c0_3 = arith.constant 0 : index
    %46 = vector.load %arg3[%c0_2, %c0_3] : memref<2x128xf32, #tpu.memory_space<vmem>>, vector<2x128xf32>
    tpu.vector_store %arg3[%c0_2, %c0_3], %45 {strides = array<i32>} : memref<2x128xf32, #tpu.memory_space<vmem>>, vector<2x128xf32>,
    return
  }
  func.func @transform_0(%arg0: i32) -> i32 {
    %c0_i32 = arith.constant 0 : i32
    %c0_i32_0 = arith.constant 0 : i32
    return %c0_i32 : i32
  }
  func.func @transform_1(%arg0: i32) -> (i32, i32) {
    %c0_i32 = arith.constant 0 : i32
    %c0_i32_0 = arith.constant 0 : i32
    return %c0_i32, %arg0 : i32, i32
  }
  func.func @transform_2(%arg0: i32) -> (i32, i32) {
    %c0_i32 = arith.constant 0 : i32
    %c0_i32_0 = arith.constant 0 : i32
    return %c0_i32, %arg0 : i32, i32
  }
}

</mosaic_0001>

<llo_original>
// kernel: mlp_forward.1
$region0: #{mlp_forward.1}
  #allocation0 [shape = 'u32[]', space=smem, size = 0x4, offset = 0x4, fixed_abs, tag = 'smem constant byte address 0x4 - core index']
  #allocation1 [shape = 'u32[144,128]{1,0:T(1,128)}', space=vmem, size = 0x12000, scoped, tag = 'internal scratch']
  %s0 = inlined_call_operand.vmem [shape: f32[10], index: 0, kind: input, shape index: {}]
  %s1 = inlined_call_operand.vmem [shape: f32[4,128], index: 1, kind: input, shape index: {}]
  %s2 = inlined_call_operand.vmem [shape: f32[2,128], index: 2, kind: output, shape index: {}]
  %s3 = sld [smem:[#allocation0]]
  $region22: #{mlp_forward.1} parent=0
    _
  %s5 = ssub.s32 1, %s3
  %s6 = scalar_select 0, %s5, %s3
  $region1: #{mlp_forward.1} parent=0
    #allocation2 [shape = 'u8[512]{0}', space=smem, size = 0x200, scoped, tag = 'input window, operand 0, single buffered']
    #allocation3 [shape = 's32[1]{0}', space=sflag, size = 0x4, scoped, tag = 'scoped memory for mlp_forward.1']
    %7 = vsyncpa [#allocation3], 0
    // Predicated region
    $region2: #{mlp_forward.1} parent=1 // pred_check
      _
    $region3: #{mlp_forward.1} parent=1 // pred_check_branch
      %9 = sbr.rel (0) target = $region5
    $region4: #{mlp_forward.1} parent=1 // pred_region
      %s11 = ssub.s32 16, 16
      %12 = vsyncadd [#allocation3], %s11
      %s14 = sshll.u32 %s0, 4
      %s15 = int_to_ptr.vmem [resolvable:$true] %s14
      %17 = dma.vmem_to_smem %s15, 16, [#allocation2], [#allocation3]
    $region5: #{mlp_forward.1} parent=1 // pred_fallthru
      _
    // Predicated region
    $region6: #{mlp_forward.1} parent=1 // pred_check
      _
    $region7: #{mlp_forward.1} parent=1 // pred_check_branch
      %19 = sbr.rel (0) target = $region9
    $region8: #{mlp_forward.1} parent=1 // pred_region
      _
    $region9: #{mlp_forward.1} parent=1 // pred_fallthru
      _
    // Predicated region
    $region10: #{mlp_forward.1} parent=1 // pred_check
      _
    $region11: #{mlp_forward.1} parent=1 // pred_check_branch
      %21 = sbr.rel (0) target = $region13
    $region12: #{mlp_forward.1} parent=1 // pred_region
      %22 = dma.done [#allocation3], 16
    $region13: #{mlp_forward.1} parent=1 // pred_fallthru
      _
    %23 = sfence
    %v24 = vld [vmem:[%s1] sm:$0xf]
    %s25 = sld [smem:[#allocation2]]
    %v26 = vstv %s25
    %v27 = vmul.f32 %v24, %v26
    %s28 = sld [smem:[#allocation2 + $0x2]]
    %v29 = vstv %s28
    %v30 = vmul.f32 %v24, %v29
    %v32 = vrot.slane %v30, 1
    %v34 = vadd.f32 %v27, %v32
    %s35 = sld [smem:[#allocation2 + $0x4]]
    %v36 = vstv %s35
    %v37 = vmul.f32 %v24, %v36
    %v39 = vrot.slane %v37, 2
    %v41 = vadd.f32 %v34, %v39
    %s42 = sld [smem:[#allocation2 + $0x6]]
    %v43 = vstv %s42
    %v44 = vmul.f32 %v24, %v43
    %v46 = vrot.slane %v44, 3
    %v48 = vadd.f32 %v41, %v46
    %s49 = sld [smem:[#allocation2 + $0x8]]
    %v50 = vstv %s49
    %v51 = vadd.f32 %v48, %v50
    %s52 = sld [smem:[#allocation2 + $0x1]]
    %v53 = vstv %s52
    %v54 = vmul.f32 %v24, %v53
    %s55 = sld [smem:[#allocation2 + $0x3]]
    %v56 = vstv %s55
    %v57 = vmul.f32 %v24, %v56
    %v59 = vrot.slane %v57, 1
    %v61 = vadd.f32 %v54, %v59
    %s62 = sld [smem:[#allocation2 + $0x5]]
    %v63 = vstv %s62
    %v64 = vmul.f32 %v24, %v63
    %v66 = vrot.slane %v64, 2
    %v68 = vadd.f32 %v61, %v66
    %s69 = sld [smem:[#allocation2 + $0x7]]
    %v70 = vstv %s69
    %v71 = vmul.f32 %v24, %v70
    %v73 = vrot.slane %v71, 3
    %v75 = vadd.f32 %v68, %v73
    %s76 = sld [smem:[#allocation2 + $0x9]]
    %v77 = vstv %s76
    %v78 = vadd.f32 %v75, %v77
    %v80 = vrot.slane %v78, 7
    %vm82 = vcmask 1040384
    %v83 = vsel %vm82, %v51, %v80
    %84 = vst [vmem:[%s2] sm:$0x3] %v83
    // Predicated region
    $region14: #{mlp_forward.1} parent=1 // pred_check
      _
    $region15: #{mlp_forward.1} parent=1 // pred_check_branch
      %86 = sbr.rel (0) target = $region17
    $region16: #{mlp_forward.1} parent=1 // pred_region
      _
    $region17: #{mlp_forward.1} parent=1 // pred_fallthru
      _
    // Predicated region
    $region18: #{mlp_forward.1} parent=1 // pred_check
      _
    $region19: #{mlp_forward.1} parent=1 // pred_check_branch
      %88 = sbr.rel (0) target = $region21
    $region20: #{mlp_forward.1} parent=1 // pred_region
      _
    $region21: #{mlp_forward.1} parent=1 // pred_fallthru
      _
    %89 = vsyncpa [#allocation3], 1

</llo_original>
